<compile_context>
chip_gen: v6e
topology: v6e:2x2x1
jax: 0.10.0
libtpu: 0.0.40
codegen_flags: <defaults>
</compile_context>

<pallas_src>
import jax
import jax.numpy as jnp
from jax.experimental import pallas as pl
from jax.experimental.pallas import tpu as pltpu


def _fold_bn(gamma, beta, mean, var, eps):
    scale = gamma / jnp.sqrt(var + eps)
    return scale, beta - scale * mean


def _pick_batch_tile(n, per_image_bytes, budget_bytes):
    """Largest divisor of n that fits the VMEM budget and keeps >=2 grid steps."""
    best = 1
    for b in range(1, n + 1):
        if n % b:
            continue
        if n >= 2 and n // b < 2:      # keep >=2 grid steps (v7x: 2 TensorCores)
            continue
        if b * per_image_bytes > budget_bytes:
            continue
        best = b
    return best


def stem_forward(x, params, *, eps=1e-5, mxu_dtype=jnp.bfloat16):
    """Fused Pallas forward of the PyTorch `Stem` module (NCHW layout)."""
    n, cin, h, w = x.shape
    cout = params["w1"].shape[0]
    hw = h * w

    # ---- fold the two BatchNorms into conv weights / biases (wrapper side) ----
    s1, t1 = _fold_bn(params["bn1_gamma"], params["bn1_beta"],
                      params["bn1_mean"], params["bn1_var"], eps)
    s2, t2 = _fold_bn(params["bn2_gamma"], params["bn2_beta"],
                      params["bn2_mean"], params["bn2_var"], eps)

    w1 = params["w1"] * s1[:, None, None, None]        # BN1 scale folded into conv1
    b1 = s1 * params["b1"] + t1                        # conv1 bias through BN1 affine
    w2 = params["w2"]
    wsc = params["wsc"][:, :, 0, 0] * s2[:, None]      # BN2 scale folded into 1x1 conv
    b_out = params["b2"] + s2 * params["bsc"] + t2     # conv2 bias + shortcut/BN2 bias

    # Tap-major flat weights: column index = t*C + ci with t = ky*3 + kx, so one
    # matmul with contraction K = 9*C replaces the nine per-tap matmuls.
    w1_flat = jnp.transpose(w1, (0, 2, 3, 1)).reshape(cout, 9 * cin)
    w2_flat = jnp.transpose(w2, (0, 2, 3, 1)).reshape(cout, 9 * cout)

    # ---- batch tile selection against the VMEM budget -------------------------
    # Rough per-image VMEM footprint of one grid step (x/out blocks are double
    # buffered; stacked tap operands and f32 intermediates also live in VMEM).
    per_image = hw * (
        2 * (cin + cout) * 4              # x block + out block (double-buffered)
        + 2 * 9 * 4                       # tap masks (f32, double-buffered)
        + 9 * (cin + cout) * (4 + 2)      # stacked tap operands (f32 + bf16 copy)
        + 5 * cout * 4                    # y1 / u / y2 / shortcut / out temporaries
        + 2 * cin * 4)                    # rolled / masked temporaries
    try:
        vmem_cap = int(pltpu.get_tpu_info().vmem_capacity_bytes)
    except Exception:                      # conservative fallback (v7x per-TC VMEM)
        vmem_cap = 64 << 20
    budget = min(24 << 20, int(0.3 * vmem_cap))
    b_tile = _pick_batch_tile(n, per_image, budget)
    if (b_tile * hw) % 128 != 0:           # lane dim must be 128-aligned unless full
        b_tile = n
    lanes = b_tile * hw
    grid = (n // b_tile,)

    # ---- per-tap lane shifts and validity masks --------------------------------
    ii = jnp.arange(h)[:, None]
    jj = jnp.arange(w)[None, :]
    shifts, masks = [], []
    for ky in range(3):
        for kx in range(3):
            off = (ky - 1) * w + (kx - 1)
            shifts.append((-off) % lanes)          # roll shift so rolled[p] = v[p+off]
            valid = ((ii + ky - 1 >= 0) & (ii + ky - 1 < h) &
                     (jj + kx - 1 >= 0) & (jj + kx - 1 < w))
            masks.append(valid.reshape(1, hw))
    shifts = tuple(shifts)
    # (9, 1, B*HW) 0/1 masks: per-image validity tiled over the batch tile.  They
    # zero out both the conv's spatial zero-padding AND any cross-image /
    # circular-wrap bleed introduced by the lane rolls (so vertical taps keep
    # their masks too, as required by the lane-concatenated batch layout).
    mask = jnp.tile(jnp.stack(masks).astype(jnp.float32), (1, 1, b_tile))

    # Lane-concatenate images: (N, Cin, H, W) -> (Cin, N*HW).
    x_cat = jnp.transpose(x.reshape(n, cin, hw), (1, 0, 2)).reshape(cin, n * hw)
    b1_col = b1.reshape(cout, 1).astype(jnp.float32)
    bo_col = b_out.reshape(cout, 1).astype(jnp.float32)

    def kernel(x_ref, w1_ref, w2_ref, wsc_ref, b1_ref, bo_ref, m_ref, o_ref):
        xf = x_ref[...].astype(jnp.float32)                  # (Cin, L) f32

        # Load each tap mask once; reused by both convs.
        tap_masks = [None if t == 4 else m_ref[t] for t in range(9)]

        def stacked_taps(v):
            # (C, L) f32 -> (9*C, L) mxu_dtype: nine shifted + masked copies,
            # tap-major along sublanes, feeding ONE K=9*C MXU matmul.
            parts = []
            for t in range(9):
                if t == 4:                                   # centre tap: no shift/mask
                    parts.append(v)
                else:
                    parts.append(pltpu.roll(v, shifts[t], axis=1) * tap_masks[t])
            return jnp.concatenate(parts, axis=0).astype(mxu_dtype)

        # conv1 (+ folded BN1) + ReLU
        y1 = jnp.dot(w1_ref[...], stacked_taps(xf),
                     preferred_element_type=jnp.float32) + b1_ref[...]
        u = jnp.maximum(y1, 0.0)
        # conv2 of the ConvBlock
        y2 = jnp.dot(w2_ref[...], stacked_taps(u),
                     preferred_element_type=jnp.float32)
        # 1x1 shortcut conv (+ folded BN2), residual add, one lane-dense store.
        sc = jnp.dot(wsc_ref[...], xf.astype(mxu_dtype),
                     preferred_element_type=jnp.float32)
        o_ref[...] = (y2 + sc + bo_ref[...]).astype(o_ref.dtype)

    vmem_limit = int(min(0.75 * vmem_cap, max(16 << 20, 2 * b_tile * per_image)))

    out_cat = pl.pallas_call(
        kernel,
        out_shape=jax.ShapeDtypeStruct((cout, n * hw), x.dtype),
        grid_spec=pltpu.PrefetchScalarGridSpec(
            num_scalar_prefetch=0,
            grid=grid,
            in_specs=[
                pl.BlockSpec((cin, lanes), lambda i: (0, i)),        # B images of x
                pl.BlockSpec((cout, 9 * cin), lambda i: (0, 0)),     # conv1 tap weights
                pl.BlockSpec((cout, 9 * cout), lambda i: (0, 0)),    # conv2 tap weights
                pl.BlockSpec((cout, cin), lambda i: (0, 0)),         # 1x1 shortcut
                pl.BlockSpec((cout, 1), lambda i: (0, 0)),           # folded bias 1
                pl.BlockSpec((cout, 1), lambda i: (0, 0)),           # folded out bias
                pl.BlockSpec((9, 1, lanes), lambda i: (0, 0, 0)),    # tap masks
            ],
            out_specs=pl.BlockSpec((cout, lanes), lambda i: (0, i)),
        ),
        compiler_params=pltpu.CompilerParams(
            dimension_semantics=("parallel",),
            vmem_limit_bytes=vmem_limit,
        ),
    )(x_cat, w1_flat.astype(mxu_dtype), w2_flat.astype(mxu_dtype),
      wsc.astype(mxu_dtype), b1_col, bo_col, mask)

    return jnp.transpose(out_cat.reshape(cout, n, hw), (1, 0, 2)).reshape(n, cout, h, w)


if __name__ == "__main__":
    key = jax.random.PRNGKey(0)
    ks = jax.random.split(key, 16)

    N, CIN, COUT, H, W = 2, 4, 8, 16, 16
    EPS = 1e-5

    x = jax.random.normal(ks[0], (N, CIN, H, W), dtype=jnp.float32)

    params = dict(
        w1=0.2 * jax.random.normal(ks[1], (COUT, CIN, 3, 3), jnp.float32),
        b1=0.1 * jax.random.normal(ks[2], (COUT,), jnp.float32),
        w2=0.2 * jax.random.normal(ks[3], (COUT, COUT, 3, 3), jnp.float32),
        b2=0.1 * jax.random.normal(ks[4], (COUT,), jnp.float32),
        wsc=0.2 * jax.random.normal(ks[5], (COUT, CIN, 1, 1), jnp.float32),
        bsc=0.1 * jax.random.normal(ks[6], (COUT,), jnp.float32),
        bn1_gamma=1.0 + 0.1 * jax.random.normal(ks[7], (COUT,), jnp.float32),
        bn1_beta=0.1 * jax.random.normal(ks[8], (COUT,), jnp.float32),
        bn1_mean=0.1 * jax.random.normal(ks[9], (COUT,), jnp.float32),
        bn1_var=jnp.abs(1.0 + 0.1 * jax.random.normal(ks[10], (COUT,), jnp.float32)),
        bn2_gamma=1.0 + 0.1 * jax.random.normal(ks[11], (COUT,), jnp.float32),
        bn2_beta=0.1 * jax.random.normal(ks[12], (COUT,), jnp.float32),
        bn2_mean=0.1 * jax.random.normal(ks[13], (COUT,), jnp.float32),
        bn2_var=jnp.abs(1.0 + 0.1 * jax.random.normal(ks[14], (COUT,), jnp.float32)),
    )

    out = stem_forward(x, params, eps=EPS)
    out = jax.block_until_ready(out)

    assert out.shape == (N, COUT, H, W)
    assert out.dtype == x.dtype

    # ---- pure-JAX reference of the PyTorch Stem forward (inference-mode BN) ----
    def conv_nchw(v, wgt, bias, pad):
        y = jax.lax.conv_general_dilated(
            v, wgt, window_strides=(1, 1), padding=pad,
            dimension_numbers=("NCHW", "OIHW", "NCHW"),
            precision=jax.lax.Precision.HIGHEST)
        return y + bias[None, :, None, None]

    def bn_nchw(v, g, b, m, var):
        inv = g / jnp.sqrt(var + EPS)
        return v * inv[None, :, None, None] + (b - m * inv)[None, :, None, None]

    c = conv_nchw(x, params["w1"], params["b1"], [(1, 1), (1, 1)])
    c = bn_nchw(c, params["bn1_gamma"], params["bn1_beta"],
                params["bn1_mean"], params["bn1_var"])
    c = conv_nchw(jax.nn.relu(c), params["w2"], params["b2"], [(1, 1), (1, 1)])
    s = conv_nchw(x, params["wsc"], params["bsc"], [(0, 0), (0, 0)])
    s = bn_nchw(s, params["bn2_gamma"], params["bn2_beta"],
                params["bn2_mean"], params["bn2_var"])
    ref = c + s

    max_err = float(jnp.max(jnp.abs(out - ref)))
    # MXU operands are bf16 (f32 accumulation); tolerance sized for that.
    assert bool(jnp.allclose(out, ref, atol=5e-2, rtol=5e-2)), f"max abs err {max_err}"

    print("KERNEL_OK")
</pallas_src>

<mosaic_0001>
module attributes {stable_mosaic.version = 11 : i64} {
  func.func @kernel(%arg0: i32, %arg1: memref<4x256xf32, #tpu.memory_space<vmem>>, %arg2: memref<8x36xbf16, #tpu.memory_space<vmem>>, %arg3: memref<8x72xbf16, #tpu.memory_space<vmem>>, %arg4: memref<8x4xbf16, #tpu.memory_space<vmem>>, %arg5: memref<8x1xf32, #tpu.memory_space<vmem>>, %arg6: memref<8x1xf32, #tpu.memory_space<vmem>>, %arg7: memref<9x1x256xf32, #tpu.memory_space<vmem>>, %arg8: memref<8x256xf32, #tpu.memory_space<vmem>>) attributes {dimension_semantics = [#tpu.dimension_semantics<parallel>], iteration_bounds = array<i64: 2>, scalar_prefetch = 0 : i64, scratch_operands = 0 : i64, tpu.core_type = #tpu.core_type<tc>, window_params = [{transform_indices = @transform_0, window_bounds = array<i64: 4, 256>}, {pipeline_mode = #tpu.pipeline_mode<synchronous>, transform_indices = @transform_1, window_bounds = array<i64: 8, 36>}, {pipeline_mode = #tpu.pipeline_mode<synchronous>, transform_indices = @transform_2, window_bounds = array<i64: 8, 72>}, {pipeline_mode = #tpu.pipeline_mode<synchronous>, transform_indices = @transform_3, window_bounds = array<i64: 8, 4>}, {pipeline_mode = #tpu.pipeline_mode<synchronous>, transform_indices = @transform_4, window_bounds = array<i64: 8, 1>}, {pipeline_mode = #tpu.pipeline_mode<synchronous>, transform_indices = @transform_5, window_bounds = array<i64: 8, 1>}, {pipeline_mode = #tpu.pipeline_mode<synchronous>, transform_indices = @transform_6, window_bounds = array<i64: 9, 1, 256>}, {transform_indices = @transform_7, window_bounds = array<i64: 8, 256>}]} {
    %c0 = arith.constant 0 : index
    %c0_0 = arith.constant 0 : index
    %0 = vector.load %arg1[%c0, %c0_0] : memref<4x256xf32, #tpu.memory_space<vmem>>, vector<4x256xf32>
    %c0_1 = arith.constant 0 : index
    %c0_2 = arith.constant 0 : index
    %c0_3 = arith.constant 0 : index
    %1 = vector.load %arg7[%c0_1, %c0_2, %c0_3] : memref<9x1x256xf32, #tpu.memory_space<vmem>>, vector<1x1x256xf32>
    %2 = vector.shape_cast %1 : vector<1x1x256xf32> to vector<1x256xf32>
    %c1 = arith.constant 1 : index
    %c0_4 = arith.constant 0 : index
    %c0_5 = arith.constant 0 : index
    %3 = vector.load %arg7[%c1, %c0_4, %c0_5] : memref<9x1x256xf32, #tpu.memory_space<vmem>>, vector<1x1x256xf32>
    %4 = vector.shape_cast %3 : vector<1x1x256xf32> to vector<1x256xf32>
    %c2 = arith.constant 2 : index
    %c0_6 = arith.constant 0 : index
    %c0_7 = arith.constant 0 : index
    %5 = vector.load %arg7[%c2, %c0_6, %c0_7] : memref<9x1x256xf32, #tpu.memory_space<vmem>>, vector<1x1x256xf32>
    %6 = vector.shape_cast %5 : vector<1x1x256xf32> to vector<1x256xf32>
    %c3 = arith.constant 3 : index
    %c0_8 = arith.constant 0 : index
    %c0_9 = arith.constant 0 : index
    %7 = vector.load %arg7[%c3, %c0_8, %c0_9] : memref<9x1x256xf32, #tpu.memory_space<vmem>>, vector<1x1x256xf32>
    %8 = vector.shape_cast %7 : vector<1x1x256xf32> to vector<1x256xf32>
    %c5 = arith.constant 5 : index
    %c0_10 = arith.constant 0 : index
    %c0_11 = arith.constant 0 : index
    %9 = vector.load %arg7[%c5, %c0_10, %c0_11] : memref<9x1x256xf32, #tpu.memory_space<vmem>>, vector<1x1x256xf32>
    %10 = vector.shape_cast %9 : vector<1x1x256xf32> to vector<1x256xf32>
    %c6 = arith.constant 6 : index
    %c0_12 = arith.constant 0 : index
    %c0_13 = arith.constant 0 : index
    %11 = vector.load %arg7[%c6, %c0_12, %c0_13] : memref<9x1x256xf32, #tpu.memory_space<vmem>>, vector<1x1x256xf32>
    %12 = vector.shape_cast %11 : vector<1x1x256xf32> to vector<1x256xf32>
    %c7 = arith.constant 7 : index
    %c0_14 = arith.constant 0 : index
    %c0_15 = arith.constant 0 : index
    %13 = vector.load %arg7[%c7, %c0_14, %c0_15] : memref<9x1x256xf32, #tpu.memory_space<vmem>>, vector<1x1x256xf32>
    %14 = vector.shape_cast %13 : vector<1x1x256xf32> to vector<1x256xf32>
    %c8 = arith.constant 8 : index
    %c0_16 = arith.constant 0 : index
    %c0_17 = arith.constant 0 : index
    %15 = vector.load %arg7[%c8, %c0_16, %c0_17] : memref<9x1x256xf32, #tpu.memory_space<vmem>>, vector<1x1x256xf32>
    %16 = vector.shape_cast %15 : vector<1x1x256xf32> to vector<1x256xf32>
    %c0_18 = arith.constant 0 : index
    %c0_19 = arith.constant 0 : index
    %17 = vector.load %arg2[%c0_18, %c0_19] : memref<8x36xbf16, #tpu.memory_space<vmem>>, vector<8x36xbf16>
    %c17_i32 = arith.constant 17 : i32
    %18 = tpu.dynamic_rotate %0 by %c17_i32 dim 1 : vector<4x256xf32>, i32 -> vector<4x256xf32>
    %19 = vector.broadcast %2 : vector<1x256xf32> to vector<4x256xf32>
    %20 = arith.mulf %18, %19 : vector<4x256xf32>
    %c16_i32 = arith.constant 16 : i32
    %21 = tpu.dynamic_rotate %0 by %c16_i32 dim 1 : vector<4x256xf32>, i32 -> vector<4x256xf32>
    %22 = vector.broadcast %4 : vector<1x256xf32> to vector<4x256xf32>
    %23 = arith.mulf %21, %22 : vector<4x256xf32>
    %c15_i32 = arith.constant 15 : i32
    %24 = tpu.dynamic_rotate %0 by %c15_i32 dim 1 : vector<4x256xf32>, i32 -> vector<4x256xf32>
    %25 = vector.broadcast %6 : vector<1x256xf32> to vector<4x256xf32>
    %26 = arith.mulf %24, %25 : vector<4x256xf32>
    %c1_i32 = arith.constant 1 : i32
    %27 = tpu.dynamic_rotate %0 by %c1_i32 dim 1 : vector<4x256xf32>, i32 -> vector<4x256xf32>
    %28 = vector.broadcast %8 : vector<1x256xf32> to vector<4x256xf32>
    %29 = arith.mulf %27, %28 : vector<4x256xf32>
    %c255_i32 = arith.constant 255 : i32
    %30 = tpu.dynamic_rotate %0 by %c255_i32 dim 1 : vector<4x256xf32>, i32 -> vector<4x256xf32>
    %31 = vector.broadcast %10 : vector<1x256xf32> to vector<4x256xf32>
    %32 = arith.mulf %30, %31 : vector<4x256xf32>
    %c241_i32 = arith.constant 241 : i32
    %33 = tpu.dynamic_rotate %0 by %c241_i32 dim 1 : vector<4x256xf32>, i32 -> vector<4x256xf32>
    %34 = vector.broadcast %12 : vector<1x256xf32> to vector<4x256xf32>
    %35 = arith.mulf %33, %34 : vector<4x256xf32>
    %c240_i32 = arith.constant 240 : i32
    %36 = tpu.dynamic_rotate %0 by %c240_i32 dim 1 : vector<4x256xf32>, i32 -> vector<4x256xf32>
    %37 = vector.broadcast %14 : vector<1x256xf32> to vector<4x256xf32>
    %38 = arith.mulf %36, %37 : vector<4x256xf32>
    %c239_i32 = arith.constant 239 : i32
    %39 = tpu.dynamic_rotate %0 by %c239_i32 dim 1 : vector<4x256xf32>, i32 -> vector<4x256xf32>
    %40 = vector.broadcast %16 : vector<1x256xf32> to vector<4x256xf32>
    %41 = arith.mulf %39, %40 : vector<4x256xf32>
    %42 = tpu.concatenate %20, %23, %26, %29, %0, %32, %35, %38, %41 in 0 : vector<4x256xf32>, vector<4x256xf32>, vector<4x256xf32>, vector<4x256xf32>, vector<4x256xf32>, vector<4x256xf32>, vector<4x256xf32>, vector<4x256xf32>, vector<4x256xf32> -> vector<36x256xf32>
    %43 = arith.truncf %42 : vector<36x256xf32> to vector<36x256xbf16>
    %cst = arith.constant dense<0.000000e+00> : vector<8x256xf32>
    %44 = tpu.matmul %17, %43, %cst {dimension_numbers = #tpu.dot_dimension_numbers<[1], [0], [0], [1], [0, 0, 1, 1], [], []>} : vector<8x36xbf16>, vector<36x256xbf16>, vector<8x256xf32> -> vector<8x256xf32>
    %c0_20 = arith.constant 0 : index
    %c0_21 = arith.constant 0 : index
    %45 = vector.load %arg5[%c0_20, %c0_21] : memref<8x1xf32, #tpu.memory_space<vmem>>, vector<8x1xf32>
    %46 = vector.broadcast %45 : vector<8x1xf32> to vector<8x256xf32>
    %47 = arith.addf %44, %46 : vector<8x256xf32>
    %cst_22 = arith.constant 0.000000e+00 : f32
    %48 = vector.broadcast %cst_22 : f32 to vector<8x256xf32>
    %49 = arith.maximumf %47, %48 : vector<8x256xf32>
    %c0_23 = arith.constant 0 : index
    %c0_24 = arith.constant 0 : index
    %50 = vector.load %arg3[%c0_23, %c0_24] : memref<8x72xbf16, #tpu.memory_space<vmem>>, vector<8x72xbf16>
    %c17_i32_25 = arith.constant 17 : i32
    %51 = tpu.dynamic_rotate %49 by %c17_i32_25 dim 1 : vector<8x256xf32>, i32 -> vector<8x256xf32>
    %52 = vector.broadcast %2 : vector<1x256xf32> to vector<8x256xf32>
    %53 = arith.mulf %51, %52 : vector<8x256xf32>
    %c16_i32_26 = arith.constant 16 : i32
    %54 = tpu.dynamic_rotate %49 by %c16_i32_26 dim 1 : vector<8x256xf32>, i32 -> vector<8x256xf32>
    %55 = vector.broadcast %4 : vector<1x256xf32> to vector<8x256xf32>
    %56 = arith.mulf %54, %55 : vector<8x256xf32>
    %c15_i32_27 = arith.constant 15 : i32
    %57 = tpu.dynamic_rotate %49 by %c15_i32_27 dim 1 : vector<8x256xf32>, i32 -> vector<8x256xf32>
    %58 = vector.broadcast %6 : vector<1x256xf32> to vector<8x256xf32>
    %59 = arith.mulf %57, %58 : vector<8x256xf32>
    %c1_i32_28 = arith.constant 1 : i32
    %60 = tpu.dynamic_rotate %49 by %c1_i32_28 dim 1 : vector<8x256xf32>, i32 -> vector<8x256xf32>
    %61 = vector.broadcast %8 : vector<1x256xf32> to vector<8x256xf32>
    %62 = arith.mulf %60, %61 : vector<8x256xf32>
    %c255_i32_29 = arith.constant 255 : i32
    %63 = tpu.dynamic_rotate %49 by %c255_i32_29 dim 1 : vector<8x256xf32>, i32 -> vector<8x256xf32>
    %64 = vector.broadcast %10 : vector<1x256xf32> to vector<8x256xf32>
    %65 = arith.mulf %63, %64 : vector<8x256xf32>
    %c241_i32_30 = arith.constant 241 : i32
    %66 = tpu.dynamic_rotate %49 by %c241_i32_30 dim 1 : vector<8x256xf32>, i32 -> vector<8x256xf32>
    %67 = vector.broadcast %12 : vector<1x256xf32> to vector<8x256xf32>
    %68 = arith.mulf %66, %67 : vector<8x256xf32>
    %c240_i32_31 = arith.constant 240 : i32
    %69 = tpu.dynamic_rotate %49 by %c240_i32_31 dim 1 : vector<8x256xf32>, i32 -> vector<8x256xf32>
    %70 = vector.broadcast %14 : vector<1x256xf32> to vector<8x256xf32>
    %71 = arith.mulf %69, %70 : vector<8x256xf32>
    %c239_i32_32 = arith.constant 239 : i32
    %72 = tpu.dynamic_rotate %49 by %c239_i32_32 dim 1 : vector<8x256xf32>, i32 -> vector<8x256xf32>
    %73 = vector.broadcast %16 : vector<1x256xf32> to vector<8x256xf32>
    %74 = arith.mulf %72, %73 : vector<8x256xf32>
    %75 = tpu.concatenate %53, %56, %59, %62, %49, %65, %68, %71, %74 in 0 : vector<8x256xf32>, vector<8x256xf32>, vector<8x256xf32>, vector<8x256xf32>, vector<8x256xf32>, vector<8x256xf32>, vector<8x256xf32>, vector<8x256xf32>, vector<8x256xf32> -> vector<72x256xf32>
    %76 = arith.truncf %75 : vector<72x256xf32> to vector<72x256xbf16>
    %cst_33 = arith.constant dense<0.000000e+00> : vector<8x256xf32>
    %77 = tpu.matmul %50, %76, %cst_33 {dimension_numbers = #tpu.dot_dimension_numbers<[1], [0], [0], [1], [0, 0, 1, 1], [], []>} : vector<8x72xbf16>, vector<72x256xbf16>, vector<8x256xf32> -> vector<8x256xf32>
    %c0_34 = arith.constant 0 : index
    %c0_35 = arith.constant 0 : index
    %78 = vector.load %arg4[%c0_34, %c0_35] : memref<8x4xbf16, #tpu.memory_space<vmem>>, vector<8x4xbf16>
    %79 = arith.truncf %0 : vector<4x256xf32> to vector<4x256xbf16>
    %cst_36 = arith.constant dense<0.000000e+00> : vector<8x256xf32>
    %80 = tpu.matmul %78, %79, %cst_36 {dimension_numbers = #tpu.dot_dimension_numbers<[1], [0], [0], [1], [0, 0, 1, 1], [], []>} : vector<8x4xbf16>, vector<4x256xbf16>, vector<8x256xf32> -> vector<8x256xf32>
    %81 = arith.addf %77, %80 : vector<8x256xf32>
    %c0_37 = arith.constant 0 : index
    %c0_38 = arith.constant 0 : index
    %82 = vector.load %arg6[%c0_37, %c0_38] : memref<8x1xf32, #tpu.memory_space<vmem>>, vector<8x1xf32>
    %83 = vector.broadcast %82 : vector<8x1xf32> to vector<8x256xf32>
    %84 = arith.addf %81, %83 : vector<8x256xf32>
    %c0_39 = arith.constant 0 : index
    %c0_40 = arith.constant 0 : index
    %85 = vector.load %arg8[%c0_39, %c0_40] : memref<8x256xf32, #tpu.memory_space<vmem>>, vector<8x256xf32>
    tpu.vector_store %arg8[%c0_39, %c0_40], %84 {strides = array<i32>} : memref<8x256xf32, #tpu.memory_space<vmem>>, vector<8x256xf32>,
    return
  }
  func.func @transform_0(%arg0: i32) -> (i32, i32) {
    %c0_i32 = arith.constant 0 : i32
    %c0_i32_0 = arith.constant 0 : i32
    return %c0_i32, %arg0 : i32, i32
  }
  func.func @transform_1(%arg0: i32) -> (i32, i32) {
    %c0_i32 = arith.constant 0 : i32
    %c0_i32_0 = arith.constant 0 : i32
    %c0_i32_1 = arith.constant 0 : i32
    return %c0_i32, %c0_i32_0 : i32, i32
  }
  func.func @transform_2(%arg0: i32) -> (i32, i32) {
    %c0_i32 = arith.constant 0 : i32
    %c0_i32_0 = arith.constant 0 : i32
    %c0_i32_1 = arith.constant 0 : i32
    return %c0_i32, %c0_i32_0 : i32, i32
  }
  func.func @transform_3(%arg0: i32) -> (i32, i32) {
    %c0_i32 = arith.constant 0 : i32
    %c0_i32_0 = arith.constant 0 : i32
    %c0_i32_1 = arith.constant 0 : i32
    return %c0_i32, %c0_i32_0 : i32, i32
  }
  func.func @transform_4(%arg0: i32) -> (i32, i32) {
    %c0_i32 = arith.constant 0 : i32
    %c0_i32_0 = arith.constant 0 : i32
    %c0_i32_1 = arith.constant 0 : i32
    return %c0_i32, %c0_i32_0 : i32, i32
  }
  func.func @transform_5(%arg0: i32) -> (i32, i32) {
    %c0_i32 = arith.constant 0 : i32
    %c0_i32_0 = arith.constant 0 : i32
    %c0_i32_1 = arith.constant 0 : i32
    return %c0_i32, %c0_i32_0 : i32, i32
  }
  func.func @transform_6(%arg0: i32) -> (i32, i32, i32) {
    %c0_i32 = arith.constant 0 : i32
    %c0_i32_0 = arith.constant 0 : i32
    %c0_i32_1 = arith.constant 0 : i32
    %c0_i32_2 = arith.constant 0 : i32
    return %c0_i32, %c0_i32_0, %c0_i32_1 : i32, i32, i32
  }
  func.func @transform_7(%arg0: i32) -> (i32, i32) {
    %c0_i32 = arith.constant 0 : i32
    %c0_i32_0 = arith.constant 0 : i32
    return %c0_i32, %arg0 : i32, i32
  }
}

</mosaic_0001>

<llo_original>
// kernel: tpu_custom_call.1
$region0: #{tpu_custom_call.1}
  #allocation0 [shape = 'u32[]', space=smem, size = 0x4, offset = 0x4, fixed_abs, tag = 'smem constant byte address 0x4 - core index']
  #allocation1 [shape = 'u32[144,128]{1,0:T(1,128)}', space=vmem, size = 0x12000, scoped, tag = 'internal scratch']
  %s0 = inlined_call_operand.vmem [shape: f32[4,512], index: 0, kind: input, shape index: {}]
  %s1 = inlined_call_operand.hbm [shape: bf16[8,36], index: 1, kind: input, shape index: {}]
  %s2 = inlined_call_operand.hbm [shape: bf16[8,72], index: 2, kind: input, shape index: {}]
  %s3 = inlined_call_operand.vmem [shape: bf16[8,4], index: 3, kind: input, shape index: {}]
  %s4 = inlined_call_operand.vmem [shape: f32[8,1], index: 4, kind: input, shape index: {}]
  %s5 = inlined_call_operand.vmem [shape: f32[8,1], index: 5, kind: input, shape index: {}]
  %s6 = inlined_call_operand.vmem [shape: f32[9,1,256], index: 6, kind: input, shape index: {}]
  %s7 = inlined_call_operand.hbm [shape: f32[8,512], index: 7, kind: output, shape index: {}]
  %s8 = sld [smem:[#allocation0]]
  $region69: #{tpu_custom_call.1} parent=0
    _
  %s10 = ssub.s32 1, %s8
  %s11 = scalar_select 0, %s10, %s8
  $region1: #{tpu_custom_call.1} parent=0
    #allocation2 [shape = 'u8[2048]{0}', space=vmem, size = 0x800, scoped, tag = 'input window, operand 1, single buffered']
    #allocation3 [shape = 's32[2]{0}', space=sflag, size = 0x8, scoped, tag = 'scoped memory for tpu_custom_call.1']
    #allocation4 [shape = 's32[2]{0}', space=sflag, size = 0x8, scoped, tag = 'scoped memory for tpu_custom_call.1']
    #allocation5 [shape = 'u8[2048]{0}', space=vmem, size = 0x800, scoped, tag = 'input window, operand 2, single buffered']
    #allocation6 [shape = 's32[1]{0}', space=sflag, size = 0x4, scoped, tag = 'scoped memory for tpu_custom_call.1']
    #allocation7 [shape = 'u8[16384]{0}', space=vmem, size = 0x4000, scoped, tag = 'output window, operand 0']
    %12 = vsyncpa [#allocation3], 0
    %13 = vsyncpa [#allocation6], 0
    %14 = vsyncpa [#allocation4], 0
    %s15 = scalar_lea.sflag [#allocation4], 1
    %16 = vsyncpa %s15, 0
    loop: start=0, step=1, limit=4
    $region2: #{tpu_custom_call.1} parent=1 // loop_pre_header
      _
    $region3: #{tpu_custom_call.1} parent=1 // loop_header
      %s18 = sphi 0, %s22
      %p19 = scmp.ge.s32.totalorder %s18, 4
      %s28 = sphi 0, %s30
      %s31 = sphi 0, %s28
      %s32 = sphi 0, %s31
      %s48 = sphi 0, %s32
      %s52 = sphi 0, %s52
      %s54 = sphi 0, %s52
      %s55 = sphi 0, %s54
      %s69 = sphi 0, %s55
      %s73 = sphi 0, %s73
      %s75 = sphi 0, %s73
      %s76 = sphi 0, %s75
      %s90 = sphi 0, %s76
      %s94 = sphi 0, %s94
      %s96 = sphi 0, %s94
      %s97 = sphi 0, %s96
      %s111 = sphi 0, %s97
      %s115 = sphi 0, %s115
      %s117 = sphi 0, %s115
      %s118 = sphi 0, %s117
      %s132 = sphi 0, %s118
      %s136 = sphi 0, %s136
      %s138 = sphi 0, %s136
      %s139 = sphi 0, %s138
      %s153 = sphi 0, %s139
      %s157 = sphi 0, %s157
      %s159 = sphi 0, %s157
      %s160 = sphi 0, %s159
      %s174 = sphi 0, %s160
      %s180 = sphi 0, %s182
      %s183 = sphi 0, %s180
      %s184 = sphi 0, %s183
      %s200 = sphi 0, %s184
    $region4: #{tpu_custom_call.1} parent=1 // loop_header_branch
      %21 = sbr.rel (%p19) target = $region8
    $region5: #{tpu_custom_call.1} parent=1 // loop_body
      %s23 = ssub.s32 %s18, 1
      %s24 = ssub.s32 %s18, 2
      %s25 = sadd.s32 %s18, 1
      %s26 = ssub.s32 %s18, %s25
      %p27 = scmp.eq.s32.totalorder %s26, 0
      %s29 = sadd.s32 %s28, 1
      %s30 = scalar_select %p27, %s28, %s29
      %p33 = pneg %p27
      %p34 = scmp.eq.s32.totalorder %s18, 1
      %p35 = por %p33, %p34
      %p36 = scmp.ne.s32.totalorder %s28, %s31
      %p37 = scmp.eq.s32.totalorder %s18, 0
      %p38 = por %p36, %p37
      %p39 = scmp.ne.s32.totalorder %s28, %s31
      %p40 = scmp.eq.s32.totalorder %s23, 1
      %p41 = por %p39, %p40
      %p42 = scmp.ne.s32.totalorder %s31, %s32
      %p43 = scmp.eq.s32.totalorder %s23, 0
      %p44 = por %p42, %p43
      %p45 = scmp.ne.s32.totalorder %s31, %s32
      %p46 = scmp.eq.s32.totalorder %s24, 1
      %p47 = por %p45, %p46
      %p49 = scmp.ne.s32.totalorder %s32, %s48
      %p50 = scmp.eq.s32.totalorder %s24, 0
      %p51 = por %p49, %p50
      %s53 = sadd.s32 %s52, 1
      %p56 = scmp.eq.s32.totalorder %s18, 1
      %p57 = scmp.ne.s32.totalorder %s52, %s54
      %p58 = scmp.eq.s32.totalorder %s18, 0
      %p59 = por %p57, %p58
      %p60 = scmp.ne.s32.totalorder %s52, %s54
      %p61 = scmp.eq.s32.totalorder %s23, 1
      %p62 = por %p60, %p61
      %p63 = scmp.ne.s32.totalorder %s54, %s55
      %p64 = scmp.eq.s32.totalorder %s23, 0
      %p65 = por %p63, %p64
      %p66 = scmp.ne.s32.totalorder %s54, %s55
      %p67 = scmp.eq.s32.totalorder %s24, 1
      %p68 = por %p66, %p67
      %p70 = scmp.ne.s32.totalorder %s55, %s69
      %p71 = scmp.eq.s32.totalorder %s24, 0
      %p72 = por %p70, %p71
      %s74 = sadd.s32 %s73, 1
      %p77 = scmp.eq.s32.totalorder %s18, 1
      %p78 = scmp.ne.s32.totalorder %s73, %s75
      %p79 = scmp.eq.s32.totalorder %s18, 0
      %p80 = por %p78, %p79
      %p81 = scmp.ne.s32.totalorder %s73, %s75
      %p82 = scmp.eq.s32.totalorder %s23, 1
      %p83 = por %p81, %p82
      %p84 = scmp.ne.s32.totalorder %s75, %s76
      %p85 = scmp.eq.s32.totalorder %s23, 0
      %p86 = por %p84, %p85
      %p87 = scmp.ne.s32.totalorder %s75, %s76
      %p88 = scmp.eq.s32.totalorder %s24, 1
      %p89 = por %p87, %p88
      %p91 = scmp.ne.s32.totalorder %s76, %s90
      %p92 = scmp.eq.s32.totalorder %s24, 0
      %p93 = por %p91, %p92
      %s95 = sadd.s32 %s94, 1
      %p98 = scmp.eq.s32.totalorder %s18, 1
      %p99 = scmp.ne.s32.totalorder %s94, %s96
      %p100 = scmp.eq.s32.totalorder %s18, 0
      %p101 = por %p99, %p100
      %p102 = scmp.ne.s32.totalorder %s94, %s96
      %p103 = scmp.eq.s32.totalorder %s23, 1
      %p104 = por %p102, %p103
      %p105 = scmp.ne.s32.totalorder %s96, %s97
      %p106 = scmp.eq.s32.totalorder %s23, 0
      %p107 = por %p105, %p106
      %p108 = scmp.ne.s32.totalorder %s96, %s97
      %p109 = scmp.eq.s32.totalorder %s24, 1
      %p110 = por %p108, %p109
      %p112 = scmp.ne.s32.totalorder %s97, %s111
      %p113 = scmp.eq.s32.totalorder %s24, 0
      %p114 = por %p112, %p113
      %s116 = sadd.s32 %s115, 1
      %p119 = scmp.eq.s32.totalorder %s18, 1
      %p120 = scmp.ne.s32.totalorder %s115, %s117
      %p121 = scmp.eq.s32.totalorder %s18, 0
      %p122 = por %p120, %p121
      %p123 = scmp.ne.s32.totalorder %s115, %s117
      %p124 = scmp.eq.s32.totalorder %s23, 1
      %p125 = por %p123, %p124
      %p126 = scmp.ne.s32.totalorder %s117, %s118
      %p127 = scmp.eq.s32.totalorder %s23, 0
      %p128 = por %p126, %p127
      %p129 = scmp.ne.s32.totalorder %s117, %s118
      %p130 = scmp.eq.s32.totalorder %s24, 1
      %p131 = por %p129, %p130
      %p133 = scmp.ne.s32.totalorder %s118, %s132
      %p134 = scmp.eq.s32.totalorder %s24, 0
      %p135 = por %p133, %p134
      %s137 = sadd.s32 %s136, 1
      %p140 = scmp.eq.s32.totalorder %s18, 1
      %p141 = scmp.ne.s32.totalorder %s136, %s138
      %p142 = scmp.eq.s32.totalorder %s18, 0
      %p143 = por %p141, %p142
      %p144 = scmp.ne.s32.totalorder %s136, %s138
      %p145 = scmp.eq.s32.totalorder %s23, 1
      %p146 = por %p144, %p145
      %p147 = scmp.ne.s32.totalorder %s138, %s139
      %p148 = scmp.eq.s32.totalorder %s23, 0
      %p149 = por %p147, %p148
      %p150 = scmp.ne.s32.totalorder %s138, %s139
      %p151 = scmp.eq.s32.totalorder %s24, 1
      %p152 = por %p150, %p151
      %p154 = scmp.ne.s32.totalorder %s139, %s153
      %p155 = scmp.eq.s32.totalorder %s24, 0
      %p156 = por %p154, %p155
      %s158 = sadd.s32 %s157, 1
      %p161 = scmp.eq.s32.totalorder %s18, 1
      %p162 = scmp.ne.s32.totalorder %s157, %s159
      %p163 = scmp.eq.s32.totalorder %s18, 0
      %p164 = por %p162, %p163
      %p165 = scmp.ne.s32.totalorder %s157, %s159
      %p166 = scmp.eq.s32.totalorder %s23, 1
      %p167 = por %p165, %p166
      %p168 = scmp.ne.s32.totalorder %s159, %s160
      %p169 = scmp.eq.s32.totalorder %s23, 0
      %p170 = por %p168, %p169
      %p171 = scmp.ne.s32.totalorder %s159, %s160
      %p172 = scmp.eq.s32.totalorder %s24, 1
      %p173 = por %p171, %p172
      %p175 = scmp.ne.s32.totalorder %s160, %s174
      %p176 = scmp.eq.s32.totalorder %s24, 0
      %p177 = por %p175, %p176
      %s178 = ssub.s32 %s18, %s25
      %p179 = scmp.eq.s32.totalorder %s178, 0
      %s181 = sadd.s32 %s180, 1
      %s182 = scalar_select %p179, %s180, %s181
      %p185 = pneg %p179
      %p186 = scmp.eq.s32.totalorder %s18, 1
      %p187 = por %p185, %p186
      %p188 = scmp.ne.s32.totalorder %s180, %s183
      %p189 = scmp.eq.s32.totalorder %s18, 0
      %p190 = por %p188, %p189
      %p191 = scmp.ne.s32.totalorder %s180, %s183
      %p192 = scmp.eq.s32.totalorder %s23, 1
      %p193 = por %p191, %p192
      %p194 = scmp.ne.s32.totalorder %s183, %s184
      %p195 = scmp.eq.s32.totalorder %s23, 0
      %p196 = por %p194, %p195
      %p197 = scmp.ne.s32.totalorder %s183, %s184
      %p198 = scmp.eq.s32.totalorder %s24, 1
      %p199 = por %p197, %p198
      %p201 = scmp.ne.s32.totalorder %s184, %s200
      %p202 = scmp.eq.s32.totalorder %s24, 0
      %p203 = por %p201, %p202
      %p204 = scmp.le.s32.totalorder 1, %s18
      %p205 = scmp.lt.s32.totalorder %s18, 3
      %p206 = pnand %p204, %p205
      %p207 = pneg %p206
      // Predicated region
      $region9: #{tpu_custom_call.1} parent=5 // pred_check
        _
      $region10: #{tpu_custom_call.1} parent=5 // pred_check_branch
        %209 = sbr.rel (%p206) target = $region12
      $region11: #{tpu_custom_call.1} parent=5 // pred_region
        %s210 = ssub.s32 %s18, 1
        // Predicated region
        $region13: #{tpu_custom_call.1} parent=11 // pred_check
          %p211 = pneg %p65
        $region14: #{tpu_custom_call.1} parent=11 // pred_check_branch
          %213 = sbr.rel (%p211) target = $region16
        $region15: #{tpu_custom_call.1} parent=11 // pred_region
          %s215 = ssub.s32 64, 64
          %216 = vsyncadd [#allocation3], %s215
          %s218 = sshll.u32 [#allocation2], 4
          %s219 = int_to_ptr.vmem [resolvable:$true] %s218
          %221 = dma.hbm_to_vmem [thread:$0]  %s1, 64, %s219, [#allocation3]
        $region16: #{tpu_custom_call.1} parent=11 // pred_fallthru
          _
        // Predicated region
        $region17: #{tpu_custom_call.1} parent=11 // pred_check
          %p222 = pneg %p86
        $region18: #{tpu_custom_call.1} parent=11 // pred_check_branch
          %224 = sbr.rel (%p222) target = $region20
        $region19: #{tpu_custom_call.1} parent=11 // pred_region
          %s226 = ssub.s32 64, 64
          %227 = vsyncadd [#allocation6], %s226
          %s229 = sshll.u32 [#allocation5], 4
          %s230 = int_to_ptr.vmem [resolvable:$true] %s229
          %232 = dma.hbm_to_vmem [thread:$0]  %s2, 64, %s230, [#allocation6]
        $region20: #{tpu_custom_call.1} parent=11 // pred_fallthru
          _
        // Predicated region
        $region21: #{tpu_custom_call.1} parent=11 // pred_check
          %p233 = pneg %p107
        $region22: #{tpu_custom_call.1} parent=11 // pred_check_branch
          %235 = sbr.rel (%p233) target = $region24
        $region23: #{tpu_custom_call.1} parent=11 // pred_region
          _
        $region24: #{tpu_custom_call.1} parent=11 // pred_fallthru
          _
        // Predicated region
        $region25: #{tpu_custom_call.1} parent=11 // pred_check
          %p236 = pneg %p128
        $region26: #{tpu_custom_call.1} parent=11 // pred_check_branch
          %238 = sbr.rel (%p236) target = $region28
        $region27: #{tpu_custom_call.1} parent=11 // pred_region
          _
        $region28: #{tpu_custom_call.1} parent=11 // pred_fallthru
          _
        // Predicated region
        $region29: #{tpu_custom_call.1} parent=11 // pred_check
          %p239 = pneg %p149
        $region30: #{tpu_custom_call.1} parent=11 // pred_check_branch
          %241 = sbr.rel (%p239) target = $region32
        $region31: #{tpu_custom_call.1} parent=11 // pred_region
          _
        $region32: #{tpu_custom_call.1} parent=11 // pred_fallthru
          _
        // Predicated region
        $region33: #{tpu_custom_call.1} parent=11 // pred_check
          %p242 = pneg %p170
        $region34: #{tpu_custom_call.1} parent=11 // pred_check_branch
          %244 = sbr.rel (%p242) target = $region36
        $region35: #{tpu_custom_call.1} parent=11 // pred_region
          _
        $region36: #{tpu_custom_call.1} parent=11 // pred_fallthru
          _
      $region12: #{tpu_custom_call.1} parent=5 // pred_fallthru
        _
      %p245 = scmp.lt.s32.totalorder %s18, 2
      // Predicated region
      $region37: #{tpu_custom_call.1} parent=5 // pred_check
        %p246 = pneg %p245
      $region38: #{tpu_custom_call.1} parent=5 // pred_check_branch
        %248 = sbr.rel (%p246) target = $region40
      $region39: #{tpu_custom_call.1} parent=5 // pred_region
        // Predicated region
        $region41: #{tpu_custom_call.1} parent=39 // pred_check
          %p249 = pneg %p38
        $region42: #{tpu_custom_call.1} parent=39 // pred_check_branch
          %251 = sbr.rel (%p249) target = $region44
        $region43: #{tpu_custom_call.1} parent=39 // pred_region
          %s252 = smul.u32 2, %s18
          %p253 = scmp.lt.s32.totalorder %s252, 3
          %s254 = scalar_select %p253, %s252, 3
          %s255 = smul.addr %s254, 4
          %s256 = scalar_lea.vmem %s0, %s255
          %s257 = smul.u32 2, %s18
        $region44: #{tpu_custom_call.1} parent=39 // pred_fallthru
          _
      $region40: #{tpu_custom_call.1} parent=5 // pred_fallthru
        _
      %p258 = scmp.le.s32.totalorder 1, %s18
      %p259 = scmp.lt.s32.totalorder %s18, 3
      %p260 = pnand %p258, %p259
      %p261 = pneg %p260
      // Predicated region
      $region45: #{tpu_custom_call.1} parent=5 // pred_check
        _
      $region46: #{tpu_custom_call.1} parent=5 // pred_check_branch
        %263 = sbr.rel (%p260) target = $region48
      $region47: #{tpu_custom_call.1} parent=5 // pred_region
        %s264 = ssub.s32 %s18, 1
        // Predicated region
        $region49: #{tpu_custom_call.1} parent=47 // pred_check
          %p265 = pneg %p65
        $region50: #{tpu_custom_call.1} parent=47 // pred_check_branch
          %267 = sbr.rel (%p265) target = $region52
        $region51: #{tpu_custom_call.1} parent=47 // pred_region
          %268 = dma.done [#allocation3], 64
        $region52: #{tpu_custom_call.1} parent=47 // pred_fallthru
          _
        // Predicated region
        $region53: #{tpu_custom_call.1} parent=47 // pred_check
          %p269 = pneg %p86
        $region54: #{tpu_custom_call.1} parent=47 // pred_check_branch
          %271 = sbr.rel (%p269) target = $region56
        $region55: #{tpu_custom_call.1} parent=47 // pred_region
          %272 = dma.done [#allocation6], 64
        $region56: #{tpu_custom_call.1} parent=47 // pred_fallthru
          _
        %s273 = smul.u32 2, %s23
        %p274 = scmp.lt.s32.totalorder %s273, 3
        %s275 = scalar_select %p274, %s273, 3
        %s276 = smul.addr %s275, 4
        %s277 = scalar_lea.vmem %s0, %s276
        %p278 = pneg %p44
        %p279 = pneg %p41
        %p280 = pneg %p65
        %p281 = pneg %p62
        %p282 = pneg %p86
        %p283 = pneg %p83
        %p284 = pneg %p107
        %p285 = pneg %p104
        %p286 = pneg %p128
        %p287 = pneg %p125
        %p288 = pneg %p149
        %p289 = pneg %p146
        %p290 = pneg %p170
        %p291 = pneg %p167
        %p292 = pneg %p196
        %p293 = pneg %p193
        %s294 = sand.u32 %s183, 1
        %s295 = scalar_lea.sflag [#allocation4], %s294
        %s296 = sand.u32 %s183, 1
        %s297 = smul.addr %s296, 16
        %s298 = scalar_lea.vmem [#allocation7], %s297
        %s299 = smul.u32 2, %s23
        %p300 = scmp.lt.s32.totalorder %s299, 3
        %s301 = scalar_select %p300, %s299, 3
        %s302 = smul.addr %s301, 4
        %s303 = scalar_lea.vmem %s0, %s302
        %s304 = smul.u32 2, %s23
        %s305 = smul.u32 2, %s23
        %v307 = vld [vmem:[%s303] sm:$0xff]
        %v308 = vld [vmem:[%s6] sm:$0x3]
        %s309 = scalar_lea.vmem %s6, 2
        %v310 = vld [vmem:[%s309] sm:$0x3]
        %s311 = scalar_lea.vmem %s6, 4
        %v312 = vld [vmem:[%s311] sm:$0x3]
        %s313 = scalar_lea.vmem %s6, 6
        %v314 = vld [vmem:[%s313] sm:$0x3]
        %s315 = scalar_lea.vmem %s6, 10
        %v316 = vld [vmem:[%s315] sm:$0x3]
        %s317 = scalar_lea.vmem %s6, 12
        %v318 = vld [vmem:[%s317] sm:$0x3]
        %s319 = scalar_lea.vmem %s6, 14
        %v320 = vld [vmem:[%s319] sm:$0x3]
        %s321 = scalar_lea.vmem %s6, 16
        %v322 = vld [vmem:[%s321] sm:$0x3]
        %v323 = vld [vmem:[#allocation2] sm:$0xf]
        %v325 = vcombine.high %v307, %v307
        %327 = vrot.lane.b32.xlu0 %v307, 17
        %v328 = vpop.permute.xlu0 %327
        %329 = vrot.lane.b32.xlu0 %v325, 17
        %v330 = vpop.permute.xlu0 %329
        %v331 = vlaneseq
        %v332 = vand.u32 %v331, 127
        %vm333 = vcmp.lt.s32.totalorder %v332, 17
        %v334 = vsel %vm333, %v328, %v330
        %v335 = vsel %vm333, %v330, %v328
        %v337 = vlaneseq
        %v338 = vshrl.u32 %v337, 7
        %v339 = vsub.s32 0, %v338
        %v340 = vrot.slane %v308, %v339
        %v341 = vlaneseq
        %v342 = vshrl.u32 %v341, 7
        %v343 = vsub.s32 1, %v342
        %v344 = vrot.slane %v308, %v343
        %v347 = vmul.f32 %v335, %v340
        %v348 = vmul.f32 %v334, %v344
        %349 = vrot.lane.b32.xlu0 %v307, 16
        %v350 = vpop.permute.xlu0 %349
        %351 = vrot.lane.b32.xlu0 %v325, 16
        %v352 = vpop.permute.xlu0 %351
        %vm353 = vcmp.lt.s32.totalorder %v332, 16
        %v354 = vsel %vm353, %v350, %v352
        %v355 = vsel %vm353, %v352, %v350
        %v357 = vlaneseq
        %v358 = vshrl.u32 %v357, 7
        %v359 = vsub.s32 0, %v358
        %v360 = vrot.slane %v310, %v359
        %v361 = vlaneseq
        %v362 = vshrl.u32 %v361, 7
        %v363 = vsub.s32 1, %v362
        %v364 = vrot.slane %v310, %v363
        %v367 = vmul.f32 %v355, %v360
        %v368 = vmul.f32 %v354, %v364
        %369 = vrot.lane.b32.xlu0 %v307, 15
        %v370 = vpop.permute.xlu0 %369
        %371 = vrot.lane.b32.xlu0 %v325, 15
        %v372 = vpop.permute.xlu0 %371
        %vm373 = vcmp.lt.s32.totalorder %v332, 15
        %v374 = vsel %vm373, %v370, %v372
        %v375 = vsel %vm373, %v372, %v370
        %v377 = vlaneseq
        %v378 = vshrl.u32 %v377, 7
        %v379 = vsub.s32 0, %v378
        %v380 = vrot.slane %v312, %v379
        %v381 = vlaneseq
        %v382 = vshrl.u32 %v381, 7
        %v383 = vsub.s32 1, %v382
        %v384 = vrot.slane %v312, %v383
        %v387 = vmul.f32 %v375, %v380
        %v388 = vmul.f32 %v374, %v384
        %389 = vrot.lane.b32.xlu0 %v307, 1
        %v390 = vpop.permute.xlu0 %389
        %391 = vrot.lane.b32.xlu0 %v325, 1
        %v392 = vpop.permute.xlu0 %391
        %vm393 = vcmp.lt.s32.totalorder %v332, 1
        %v394 = vsel %vm393, %v390, %v392
        %v395 = vsel %vm393, %v392, %v390
        %v397 = vlaneseq
        %v398 = vshrl.u32 %v397, 7
        %v399 = vsub.s32 0, %v398
        %v400 = vrot.slane %v314, %v399
        %v401 = vlaneseq
        %v402 = vshrl.u32 %v401, 7
        %v403 = vsub.s32 1, %v402
        %v404 = vrot.slane %v314, %v403
        %v407 = vmul.f32 %v395, %v400
        %v408 = vmul.f32 %v394, %v404
        %409 = vrot.lane.b32.xlu0 %v307, 127
        %v410 = vpop.permute.xlu0 %409
        %411 = vrot.lane.b32.xlu0 %v325, 127
        %v412 = vpop.permute.xlu0 %411
        %vm413 = vcmp.lt.s32.totalorder %v332, 127
        %v414 = vsel %vm413, %v410, %v412
        %v415 = vsel %vm413, %v412, %v410
        %v417 = vlaneseq
        %v418 = vshrl.u32 %v417, 7
        %v419 = vsub.s32 0, %v418
        %v420 = vrot.slane %v316, %v419
        %v421 = vlaneseq
        %v422 = vshrl.u32 %v421, 7
        %v423 = vsub.s32 1, %v422
        %v424 = vrot.slane %v316, %v423
        %v427 = vmul.f32 %v414, %v420
        %v428 = vmul.f32 %v415, %v424
        %429 = vrot.lane.b32.xlu0 %v307, 113
        %v430 = vpop.permute.xlu0 %429
        %431 = vrot.lane.b32.xlu0 %v325, 113
        %v432 = vpop.permute.xlu0 %431
        %vm433 = vcmp.lt.s32.totalorder %v332, 113
        %v434 = vsel %vm433, %v430, %v432
        %v435 = vsel %vm433, %v432, %v430
        %v437 = vlaneseq
        %v438 = vshrl.u32 %v437, 7
        %v439 = vsub.s32 0, %v438
        %v440 = vrot.slane %v318, %v439
        %v441 = vlaneseq
        %v442 = vshrl.u32 %v441, 7
        %v443 = vsub.s32 1, %v442
        %v444 = vrot.slane %v318, %v443
        %v447 = vmul.f32 %v434, %v440
        %v448 = vmul.f32 %v435, %v444
        %449 = vrot.lane.b32.xlu0 %v307, 112
        %v450 = vpop.permute.xlu0 %449
        %451 = vrot.lane.b32.xlu0 %v325, 112
        %v452 = vpop.permute.xlu0 %451
        %vm453 = vcmp.lt.s32.totalorder %v332, 112
        %v454 = vsel %vm453, %v450, %v452
        %v455 = vsel %vm453, %v452, %v450
        %v457 = vlaneseq
        %v458 = vshrl.u32 %v457, 7
        %v459 = vsub.s32 0, %v458
        %v460 = vrot.slane %v320, %v459
        %v461 = vlaneseq
        %v462 = vshrl.u32 %v461, 7
        %v463 = vsub.s32 1, %v462
        %v464 = vrot.slane %v320, %v463
        %v467 = vmul.f32 %v454, %v460
        %v468 = vmul.f32 %v455, %v464
        %469 = vrot.lane.b32.xlu0 %v307, 111
        %v470 = vpop.permute.xlu0 %469
        %471 = vrot.lane.b32.xlu0 %v325, 111
        %v472 = vpop.permute.xlu0 %471
        %vm473 = vcmp.lt.s32.totalorder %v332, 111
        %v474 = vsel %vm473, %v470, %v472
        %v475 = vsel %vm473, %v472, %v470
        %v477 = vlaneseq
        %v478 = vshrl.u32 %v477, 7
        %v479 = vsub.s32 0, %v478
        %v480 = vrot.slane %v322, %v479
        %v481 = vlaneseq
        %v482 = vshrl.u32 %v481, 7
        %v483 = vsub.s32 1, %v482
        %v484 = vrot.slane %v322, %v483
        %v487 = vmul.f32 %v474, %v480
        %v488 = vmul.f32 %v475, %v484
        %v491 = vrot.slane %v367, 4
        %v492 = vrot.slane %v368, 4
        %v497 = vrot.slane %v407, 4
        %v498 = vrot.slane %v408, 4
        %v503 = vrot.slane %v427, 4
        %v504 = vrot.slane %v428, 4
        %v509 = vrot.slane %v467, 4
        %v510 = vrot.slane %v468, 4
        %vm513 = vcmask 1043456
        %v514 = vsel %vm513, %v347, %v491
        %v515 = vsel %vm513, %v348, %v492
        %v516 = vsel %vm513, %v387, %v497
        %v517 = vsel %vm513, %v388, %v498
        %v518 = vsel %vm513, %v307, %v503
        %v519 = vsel %vm513, %v325, %v504
        %v520 = vsel %vm513, %v447, %v509
        %v521 = vsel %vm513, %v448, %v510
        %v522 = vpack.c.bf16 %v516, %v514
        %v523 = vpack.c.bf16 %v517, %v515
        %v524 = vpack.c.bf16 %v520, %v518
        %v525 = vpack.c.bf16 %v521, %v519
        %v526 = vpack.c.bf16 %v487, %v487
        %v527 = vpack.c.bf16 %v488, %v488
        %v528 = vld [vmem:[%s4] sm:$0xff]
        %530 = vset.pattern.permute.xlu0 0
        %531 = vperm.xlu0 %530, %v528
        %v532 = vpop.permute.xlu0 %531
        %vm534 = vcmask 293888
        %v536 = vsel %vm534, %v323, 0
        %vm538 = vcmask 1041408
        %v540 = vsel %vm538, %v526, 0
        %v543 = vsel %vm538, %v527, 0
        %545 = vmatprep.subr.bf16.mxu0 0
        %546 = vmatpush1.bf16.msra.mxu0 0
        %547 = vmatprep.subr.bf16.mxu0 0
        %548 = vmatpush1.bf16.msra.mxu0 0
        %549 = vmatprep.subr.bf16.mxu0 0
        %550 = vmatpush1.bf16.msra.mxu0 0
        %551 = vmatprep.subr.bf16.mxu0 0
        %552 = vmatpush1.bf16.msra.mxu0 0
        %553 = vmatprep.subr.bf16.mxu0 0
        %554 = vmatpush1.bf16.msra.mxu0 0
        %555 = vmatprep.subr.bf16.mxu0 %v543
        %556 = vmatpush1.bf16.msra.mxu0 %v540
        %557 = vmatprep.subr.bf16.mxu0 %v525
        %558 = vmatpush1.bf16.msra.mxu0 %v524
        %559 = vmatprep.subr.bf16.mxu0 %v523
        %560 = vmatpush1.bf16.msra.mxu0 %v522
        %561 = vmatprep.subr.bf16.mxu0 0
        %562 = vmatpush2.bf16.msra.mxu0 0
        %563 = vmatprep.subr.bf16.mxu0 0
        %564 = vmatpush2.bf16.msra.mxu0 0
        %565 = vmatprep.subr.bf16.mxu0 0
        %566 = vmatpush2.bf16.msra.mxu0 0
        %567 = vmatprep.subr.bf16.mxu0 0
        %568 = vmatpush2.bf16.msra.mxu0 0
        %569 = vmatprep.subr.bf16.mxu0 0
        %570 = vmatpush2.bf16.msra.mxu0 0
        %571 = vmatprep.subr.bf16.mxu0 0
        %572 = vmatpush2.bf16.msra.mxu0 0
        %573 = vmatprep.subr.bf16.mxu0 0
        %574 = vmatpush2.bf16.msra.mxu0 0
        %575 = vmatprep.subr.bf16.mxu0 0
        %576 = vmatpush2.bf16.msra.mxu0 0
        %577 = vmatprep.mubr.bf16.mxu0 0
        %578 = vmatmul.mubr.bf16.gmra.mxu0 %v536
        %v579 = vpop.f32.mrf.mxu0
        %v580 = vadd.f32 %v532, %v579
        %v581 = vpop.f32.mrf.mxu0
        %v582 = vadd.f32 %v532, %v581
        %v583 = vpop.f32.mrf.mxu0
        %v584 = vpop.f32.mrf.mxu0
        %585 = vdwg.mxu0
        %v586 = vmax.f32 %v580, 0.0
        %v587 = vmax.f32 %v582, 0.0
        %v588 = vld [vmem:[#allocation5] sm:$0xf]
        %589 = vrot.lane.b32.xlu0 %v586, 17
        %v590 = vpop.permute.xlu0 %589
        %591 = vrot.lane.b32.xlu0 %v587, 17
        %v592 = vpop.permute.xlu0 %591
        %v593 = vsel %vm333, %v590, %v592
        %v594 = vsel %vm333, %v592, %v590
        %v595 = vmul.f32 %v594, %v340
        %v596 = vmul.f32 %v593, %v344
        %597 = vrot.lane.b32.xlu0 %v586, 16
        %v598 = vpop.permute.xlu0 %597
        %599 = vrot.lane.b32.xlu0 %v587, 16
        %v600 = vpop.permute.xlu0 %599
        %v601 = vsel %vm353, %v598, %v600
        %v602 = vsel %vm353, %v600, %v598
        %v603 = vmul.f32 %v602, %v360
        %v604 = vmul.f32 %v601, %v364
        %605 = vrot.lane.b32.xlu0 %v586, 15
        %v606 = vpop.permute.xlu0 %605
        %607 = vrot.lane.b32.xlu0 %v587, 15
        %v608 = vpop.permute.xlu0 %607
        %v609 = vsel %vm373, %v606, %v608
        %v610 = vsel %vm373, %v608, %v606
        %v611 = vmul.f32 %v610, %v380
        %v612 = vmul.f32 %v609, %v384
        %613 = vrot.lane.b32.xlu0 %v586, 1
        %v614 = vpop.permute.xlu0 %613
        %615 = vrot.lane.b32.xlu0 %v587, 1
        %v616 = vpop.permute.xlu0 %615
        %v617 = vsel %vm393, %v614, %v616
        %v618 = vsel %vm393, %v616, %v614
        %v619 = vmul.f32 %v618, %v400
        %v620 = vmul.f32 %v617, %v404
        %621 = vrot.lane.b32.xlu0 %v586, 127
        %v622 = vpop.permute.xlu0 %621
        %623 = vrot.lane.b32.xlu0 %v587, 127
        %v624 = vpop.permute.xlu0 %623
        %v625 = vsel %vm413, %v622, %v624
        %v626 = vsel %vm413, %v624, %v622
        %v627 = vmul.f32 %v625, %v420
        %v628 = vmul.f32 %v626, %v424
        %629 = vrot.lane.b32.xlu0 %v586, 113
        %v630 = vpop.permute.xlu0 %629
        %631 = vrot.lane.b32.xlu0 %v587, 113
        %v632 = vpop.permute.xlu0 %631
        %v633 = vsel %vm433, %v630, %v632
        %v634 = vsel %vm433, %v632, %v630
        %v635 = vmul.f32 %v633, %v440
        %v636 = vmul.f32 %v634, %v444
        %637 = vrot.lane.b32.xlu0 %v586, 112
        %v638 = vpop.permute.xlu0 %637
        %639 = vrot.lane.b32.xlu0 %v587, 112
        %v640 = vpop.permute.xlu0 %639
        %v641 = vsel %vm453, %v638, %v640
        %v642 = vsel %vm453, %v640, %v638
        %v643 = vmul.f32 %v641, %v460
        %v644 = vmul.f32 %v642, %v464
        %645 = vrot.lane.b32.xlu0 %v586, 111
        %v646 = vpop.permute.xlu0 %645
        %647 = vrot.lane.b32.xlu0 %v587, 111
        %v648 = vpop.permute.xlu0 %647
        %v649 = vsel %vm473, %v646, %v648
        %v650 = vsel %vm473, %v648, %v646
        %v651 = vmul.f32 %v649, %v480
        %v652 = vmul.f32 %v650, %v484
        %v653 = vpack.c.bf16 %v603, %v595
        %v654 = vpack.c.bf16 %v604, %v596
        %v655 = vpack.c.bf16 %v619, %v611
        %v656 = vpack.c.bf16 %v620, %v612
        %v657 = vpack.c.bf16 %v627, %v586
        %v658 = vpack.c.bf16 %v628, %v587
        %v659 = vpack.c.bf16 %v643, %v635
        %v660 = vpack.c.bf16 %v644, %v636
        %v661 = vpack.c.bf16 %v651, %v651
        %v662 = vpack.c.bf16 %v652, %v652
        %v663 = vld [vmem:[%s3] sm:$0xf]
        %v664 = vpack.c.bf16 %v307, %v307
        %v665 = vpack.c.bf16 %v325, %v325
        %vm666 = vcmask 31744
        %v668 = vsel %vm666, %v663, 0
        %v671 = vsel %vm538, %v664, 0
        %v674 = vsel %vm538, %v665, 0
        %676 = vmatprep.subr.bf16.mxu0 0
        %677 = vmatpush1.bf16.msra.mxu0 0
        %678 = vmatprep.subr.bf16.mxu0 0
        %679 = vmatpush1.bf16.msra.mxu0 0
        %680 = vmatprep.subr.bf16.mxu0 0
        %681 = vmatpush1.bf16.msra.mxu0 0
        %682 = vmatprep.subr.bf16.mxu0 0
        %683 = vmatpush1.bf16.msra.mxu0 0
        %684 = vmatprep.subr.bf16.mxu0 0
        %685 = vmatpush1.bf16.msra.mxu0 0
        %686 = vmatprep.subr.bf16.mxu0 0
        %687 = vmatpush1.bf16.msra.mxu0 0
        %688 = vmatprep.subr.bf16.mxu0 0
        %689 = vmatpush1.bf16.msra.mxu0 0
        %690 = vmatprep.subr.bf16.mxu0 %v674
        %691 = vmatpush1.bf16.msra.mxu0 %v671
        %692 = vmatprep.subr.bf16.mxu0 0
        %693 = vmatpush2.bf16.msra.mxu0 0
        %694 = vmatprep.subr.bf16.mxu0 0
        %695 = vmatpush2.bf16.msra.mxu0 0
        %696 = vmatprep.subr.bf16.mxu0 0
        %697 = vmatpush2.bf16.msra.mxu0 0
        %698 = vmatprep.subr.bf16.mxu0 0
        %699 = vmatpush2.bf16.msra.mxu0 0
        %700 = vmatprep.subr.bf16.mxu0 0
        %701 = vmatpush2.bf16.msra.mxu0 0
        %702 = vmatprep.subr.bf16.mxu0 0
        %703 = vmatpush2.bf16.msra.mxu0 0
        %704 = vmatprep.subr.bf16.mxu0 0
        %705 = vmatpush2.bf16.msra.mxu0 0
        %706 = vmatprep.subr.bf16.mxu0 0
        %707 = vmatpush2.bf16.msra.mxu0 0
        %708 = vmatprep.mubr.bf16.mxu0 0
        %709 = vmatmul.mubr.bf16.gmra.mxu0 %v668
        %v710 = vpop.f32.mrf.mxu0
        %v711 = vadd.f32 0.0, %v710
        %v712 = vpop.f32.mrf.mxu0
        %v713 = vadd.f32 0.0, %v712
        %v714 = vpop.f32.mrf.mxu0
        %v715 = vpop.f32.mrf.mxu0
        %716 = vdwg.mxu0
        %vm717 = vcmask 588800
        %v719 = vsel %vm717, %v588, 0
        %v722 = vsel %vm513, %v661, 0
        %v725 = vsel %vm513, %v662, 0
        %727 = vmatprep.subr.bf16.mxu0 0
        %728 = vmatpush1.bf16.msra.mxu0 0
        %729 = vmatprep.subr.bf16.mxu0 0
        %730 = vmatpush1.bf16.msra.mxu0 0
        %731 = vmatprep.subr.bf16.mxu0 0
        %732 = vmatpush1.bf16.msra.mxu0 0
        %733 = vmatprep.subr.bf16.mxu0 %v725
        %734 = vmatpush1.bf16.msra.mxu0 %v722
        %735 = vmatprep.subr.bf16.mxu0 %v660
        %736 = vmatpush1.bf16.msra.mxu0 %v659
        %737 = vmatprep.subr.bf16.mxu0 %v658
        %738 = vmatpush1.bf16.msra.mxu0 %v657
        %739 = vmatprep.subr.bf16.mxu0 %v656
        %740 = vmatpush1.bf16.msra.mxu0 %v655
        %741 = vmatprep.subr.bf16.mxu0 %v654
        %742 = vmatpush1.bf16.msra.mxu0 %v653
        %743 = vmatprep.subr.bf16.mxu0 0
        %744 = vmatpush2.bf16.msra.mxu0 0
        %745 = vmatprep.subr.bf16.mxu0 0
        %746 = vmatpush2.bf16.msra.mxu0 0
        %747 = vmatprep.subr.bf16.mxu0 0
        %748 = vmatpush2.bf16.msra.mxu0 0
        %749 = vmatprep.subr.bf16.mxu0 0
        %750 = vmatpush2.bf16.msra.mxu0 0
        %751 = vmatprep.subr.bf16.mxu0 0
        %752 = vmatpush2.bf16.msra.mxu0 0
        %753 = vmatprep.subr.bf16.mxu0 0
        %754 = vmatpush2.bf16.msra.mxu0 0
        %755 = vmatprep.subr.bf16.mxu0 0
        %756 = vmatpush2.bf16.msra.mxu0 0
        %757 = vmatprep.subr.bf16.mxu0 0
        %758 = vmatpush2.bf16.msra.mxu0 0
        %759 = vmatprep.mubr.bf16.mxu0 0
        %760 = vmatmul.mubr.bf16.gmra.mxu0 %v719
        %v761 = vpop.f32.mrf.mxu0
        %v762 = vadd.f32 %v711, %v761
        %v763 = vpop.f32.mrf.mxu0
        %v764 = vadd.f32 %v713, %v763
        %v765 = vpop.f32.mrf.mxu0
        %v766 = vpop.f32.mrf.mxu0
        %767 = vdwg.mxu0
        %v768 = vld [vmem:[%s5] sm:$0xff]
        %770 = vset.pattern.permute.xlu0 0
        %771 = vperm.xlu0 %770, %v768
        %v772 = vpop.permute.xlu0 %771
        %v774 = vadd.f32 %v762, %v772
        %v775 = vadd.f32 %v764, %v772
        %776 = vst [vmem:[%s298] sm:$0xff] %v774
        %777 = vst [vmem:[%s298 + $0x8] sm:$0xff] %v775
        %s778 = sand.u32 %s183, 1
        %s779 = scalar_lea.sflag [#allocation4], %s778
        %s780 = sand.u32 %s183, 1
        %s781 = smul.addr %s780, 16
        %s782 = scalar_lea.vmem [#allocation7], %s781
        // Predicated region
        $region57: #{tpu_custom_call.1} parent=47 // pred_check
          %p783 = pneg %p193
        $region58: #{tpu_custom_call.1} parent=47 // pred_check_branch
          %785 = sbr.rel (%p783) target = $region60
        $region59: #{tpu_custom_call.1} parent=47 // pred_region
          %s786 = smul.u32 2, %s23
          %s788 = ssub.s32 256, 256
          %789 = vsyncadd %s779, %s788
          %s790 = smul.addr %s786, 128
          %s791 = scalar_lea.hbm %s7, %s790
          %s793 = sshll.u32 %s782, 4
          %s794 = int_to_ptr.vmem [resolvable:$true] %s793
          %796 = dma.vmem_to_hbm [thread:$0]  %s794, 256, %s791, %s779
        $region60: #{tpu_custom_call.1} parent=47 // pred_fallthru
          _
      $region48: #{tpu_custom_call.1} parent=5 // pred_fallthru
        _
      %p797 = scmp.le.s32.totalorder 2, %s18
      // Predicated region
      $region61: #{tpu_custom_call.1} parent=5 // pred_check
        %p798 = pneg %p797
      $region62: #{tpu_custom_call.1} parent=5 // pred_check_branch
        %800 = sbr.rel (%p798) target = $region64
      $region63: #{tpu_custom_call.1} parent=5 // pred_region
        %s801 = ssub.s32 %s18, 2
        // Predicated region
        $region65: #{tpu_custom_call.1} parent=63 // pred_check
          %p802 = pneg %p199
        $region66: #{tpu_custom_call.1} parent=63 // pred_check_branch
          %804 = sbr.rel (%p802) target = $region68
        $region67: #{tpu_custom_call.1} parent=63 // pred_region
          %s805 = sand.u32 %s184, 1
          %s806 = scalar_lea.sflag [#allocation4], %s805
          %s807 = sand.u32 %s184, 1
          %s808 = smul.addr %s807, 16
          %s809 = scalar_lea.vmem [#allocation7], %s808
          %810 = dma.done %s806, 256
        $region68: #{tpu_custom_call.1} parent=63 // pred_fallthru
          _
      $region64: #{tpu_custom_call.1} parent=5 // pred_fallthru
        _
    $region6: #{tpu_custom_call.1} parent=1 // loop_footer
      %s22 = sadd.s32 1, %s18
    $region7: #{tpu_custom_call.1} parent=1 // loop_footer_branch
      %17 = sbr.rel target = $region3
    $region8: #{tpu_custom_call.1} parent=1 // loop_exit
      _
    %811 = vsyncpa [#allocation3], 1
    %s812 = scalar_lea.sflag [#allocation3], 1
    %813 = vsyncpa %s812, 1
    %814 = vsyncpa [#allocation6], 1
    %815 = vsyncpa [#allocation4], 1
    %s816 = scalar_lea.sflag [#allocation4], 1
    %817 = vsyncpa %s816, 1

</llo_original>
